<compile_context>
chip_gen: v7x
topology: tpu7x:2x2x1
jax: 0.10.0
libtpu: 0.0.40
codegen_flags: <defaults>
</compile_context>

<pallas_src>
import numpy as np
import jax
import jax.numpy as jnp
from jax.experimental import pallas as pl
from jax.experimental.pallas import tpu as pltpu


def _round_up(x, m):
    return ((x + m - 1) // m) * m


def _cdiv(a, b):
    return (a + b - 1) // b


def make_qnet_weights(dimension: int):
    """Deterministic weight construction, identical to Qnet.__init__ (reference only)."""
    d = dimension
    idx = np.arange(2 ** d)
    tpp = ((idx[:, None] >> np.arange(d - 1, -1, -1)[None, :]) & 1).astype(np.float64)
    S = np.concatenate(((tpp == 0) * -1.0 + tpp,
                        np.full((2 ** d, 1), -1.0)), axis=1)           # (2**d, d+1)
    w3 = (-np.prod(S, axis=1)).reshape(1, 2 ** d)                      # (1, 2**d)
    return jnp.asarray(S, jnp.float32), jnp.asarray(w3, jnp.float32)


def _make_qnet_kernel(d: int, cs: int, n_chunks: int):
    """Kernel specialized on the Qnet dimension, lane-chunk size and chunk count."""

    def kernel(x_ref, signs_ref, w3n_ref, o_ref):
        # x_ref: (d+1, TB)   signs_ref: (2**(d-1), d-1)   w3n_ref: (2**(d-1), 1)
        # o_ref: (1, TB)
        signs = signs_ref[...]
        w3n = w3n_ref[...]

        def softplus(h):
            # numerically stable: max(h, 0) + log1p(exp(-|h|))
            return jnp.maximum(h, 0.0) + jnp.log1p(jnp.exp(-jnp.abs(h)))

        # Static chunk starts (multiples of 128) -> aligned unmasked vector
        # loads/stores; the per-chunk o_ref store ends all slab live ranges.
        for ci in range(n_chunks):
            xc = x_ref[:, pl.ds(ci * cs, cs)]                  # (d+1, cs)
            x0 = xc[0:1, :]
            # shared half-slab: c[j] = sum_{k>=1} signs[j, k-1] * x_k  -  x_d
            c = signs[:, 0:1] * xc[1:2, :]
            for k in range(2, d):
                c = c + signs[:, k - 1:k] * xc[k:k + 1, :]
            c = c - xc[d:d + 1, :]
            sp_lo = softplus(c - x0)       # rows of h with S[:, 0] == -1
            sp_hi = softplus(c + x0)       # rows of h with S[:, 0] == +1
            # out = sum_i w3[i] * (-softplus(h_i))
            #     = sum_j (-w3[j]) * (sp_lo[j] - sp_hi[j])     (w3 upper = -w3 lower)
            o_ref[:, pl.ds(ci * cs, cs)] = jnp.sum(
                w3n * (sp_lo - sp_hi), axis=0, keepdims=True)

    return kernel


def qnet_forward(x, dimension: int, *, batch_tile: int = 32768, lane_chunk: int = 1024):
    """x: (B, dim+1) float32  ->  (B, 1) float32  (Qnet(dimension) forward)."""
    d = int(dimension)
    if d < 2:
        raise ValueError("qnet_forward kernel requires dimension >= 2")
    B, din = x.shape
    assert din == d + 1, f"expected x with {d + 1} features, got {din}"
    half = 2 ** (d - 1)

    # Compile-time specialization constants (all entries are +/-1).
    j = np.arange(half)
    signs_np = np.stack(
        [2.0 * ((j >> (d - 1 - k)) & 1) - 1.0 for k in range(1, d)],
        axis=1).astype(np.float32)                                     # (half, d-1)
    # -w3 restricted to the lower-half rows == product of the remaining sign cols.
    w3n_np = np.prod(signs_np, axis=1, keepdims=True).astype(np.float32)  # (half, 1)

    # Batch tile on the lane axis: big enough to amortize per-grid-step overhead,
    # capped so the v7x megacore gets >= 2 grid steps when the batch allows it.
    TB = min(batch_tile, _round_up(_cdiv(B, 2), 128))
    TB = _round_up(max(TB, 128), 128)
    # Lane-chunk size: multiple of 128 dividing TB; bounds in-kernel vreg pressure.
    CS = max(128, (min(lane_chunk, TB) // 128) * 128)
    while TB % CS:
        CS -= 128
    n_chunks = TB // CS

    # Transposed input (batch on lanes).  Pad only to the next multiple of 128; the
    # last grid block may be partial (Pallas masks its write-back; any garbage
    # columns affect only their own lane and are sliced off below).
    B128 = _round_up(B, 128)
    xt = x.T.astype(jnp.float32)
    if B128 != B:
        xt = jnp.zeros((din, B128), jnp.float32).at[:, :B].set(xt)
    grid = (_cdiv(B128, TB),)

    signs = jnp.asarray(signs_np)
    w3n = jnp.asarray(w3n_np)

    H = 2 ** d
    flops = B128 * (2 * H * din + 6 * H)
    transcendentals = 2 * H * B128
    bytes_accessed = 4 * (din * B128 + B128 + signs.size + w3n.size)

    out_t = pl.pallas_call(
        _make_qnet_kernel(d, CS, n_chunks),
        out_shape=jax.ShapeDtypeStruct((1, B128), jnp.float32),
        grid_spec=pltpu.PrefetchScalarGridSpec(
            num_scalar_prefetch=0,
            grid=grid,
            in_specs=[
                pl.BlockSpec((din, TB), lambda i: (0, i)),        # x tile (pipelined)
                pl.BlockSpec((half, d - 1), lambda i: (0, 0)),    # signs: VMEM resident
                pl.BlockSpec((half, 1), lambda i: (0, 0)),        # -w3 (lower half)
            ],
            out_specs=pl.BlockSpec((1, TB), lambda i: (0, i)),
        ),
        compiler_params=pltpu.CompilerParams(
            dimension_semantics=("parallel",)),                   # v7x: 2 TCs; no-op v5e/v6e
        cost_estimate=pl.CostEstimate(
            flops=flops,
            transcendentals=transcendentals,
            bytes_accessed=bytes_accessed),
    )(xt, signs, w3n)

    return out_t[:, :B].T                                             # (B, 1)


def _reference(x, S, w3):
    # pure-JAX reference, same float32 math as the PyTorch module
    return (-jnp.log(1.0 + jnp.exp(x @ S.T))) @ w3.T


if __name__ == "__main__":
    dimension = 4                      # hidden = 2**4 = 16, input features = 5
    batch = 8

    S, w3 = make_qnet_weights(dimension)
    key = jax.random.PRNGKey(0)
    x = jax.random.normal(key, (batch, dimension + 1), dtype=jnp.float32)

    out = jax.block_until_ready(qnet_forward(x, dimension))
    np.testing.assert_allclose(np.asarray(out), np.asarray(_reference(x, S, w3)),
                               rtol=1e-5, atol=1e-4)

    # second shape: exercises the multi-step grid and the partial last block path
    x2 = jax.random.normal(jax.random.PRNGKey(1), (300, dimension + 1),
                           dtype=jnp.float32)
    out2 = jax.block_until_ready(qnet_forward(x2, dimension))
    np.testing.assert_allclose(np.asarray(out2), np.asarray(_reference(x2, S, w3)),
                               rtol=1e-5, atol=1e-4)

    print("KERNEL_OK")
</pallas_src>

<mosaic_0001>
module attributes {stable_mosaic.version = 11 : i64} {
  func.func @kernel(%arg0: i32, %arg1: memref<5x128xf32, #tpu.memory_space<vmem>>, %arg2: memref<8x3xf32, #tpu.memory_space<vmem>>, %arg3: memref<8x1xf32, #tpu.memory_space<vmem>>, %arg4: memref<1x128xf32, #tpu.memory_space<vmem>>) attributes {dimension_semantics = [#tpu.dimension_semantics<parallel>], iteration_bounds = array<i64: 1>, scalar_prefetch = 0 : i64, scratch_operands = 0 : i64, tpu.core_type = #tpu.core_type<tc>, window_params = [{transform_indices = @transform_0, window_bounds = array<i64: 5, 128>}, {pipeline_mode = #tpu.pipeline_mode<synchronous>, transform_indices = @transform_1, window_bounds = array<i64: 8, 3>}, {pipeline_mode = #tpu.pipeline_mode<synchronous>, transform_indices = @transform_2, window_bounds = array<i64: 8, 1>}, {transform_indices = @transform_3, window_bounds = array<i64: 1, 128>}]} {
    %c0 = arith.constant 0 : index
    %c0_0 = arith.constant 0 : index
    %0 = vector.load %arg2[%c0, %c0_0] : memref<8x3xf32, #tpu.memory_space<vmem>>, vector<8x3xf32>
    %c0_1 = arith.constant 0 : index
    %c0_2 = arith.constant 0 : index
    %1 = vector.load %arg3[%c0_1, %c0_2] : memref<8x1xf32, #tpu.memory_space<vmem>>, vector<8x1xf32>
    %c0_3 = arith.constant 0 : index
    %c0_4 = arith.constant 0 : index
    %2 = vector.load %arg1[%c0_3, %c0_4] : memref<5x128xf32, #tpu.memory_space<vmem>>, vector<5x128xf32>
    %3 = vector.extract_strided_slice %2 {offsets = [0, 0], sizes = [1, 128], strides = [1, 1]} : vector<5x128xf32> to vector<1x128xf32>
    %4 = vector.extract_strided_slice %0 {offsets = [0, 0], sizes = [8, 1], strides = [1, 1]} : vector<8x3xf32> to vector<8x1xf32>
    %5 = vector.extract_strided_slice %2 {offsets = [1, 0], sizes = [1, 128], strides = [1, 1]} : vector<5x128xf32> to vector<1x128xf32>
    %6 = vector.broadcast %4 : vector<8x1xf32> to vector<8x128xf32>
    %7 = vector.broadcast %5 : vector<1x128xf32> to vector<8x128xf32>
    %8 = arith.mulf %6, %7 : vector<8x128xf32>
    %9 = vector.extract_strided_slice %0 {offsets = [0, 1], sizes = [8, 1], strides = [1, 1]} : vector<8x3xf32> to vector<8x1xf32>
    %10 = vector.extract_strided_slice %2 {offsets = [2, 0], sizes = [1, 128], strides = [1, 1]} : vector<5x128xf32> to vector<1x128xf32>
    %11 = vector.broadcast %9 : vector<8x1xf32> to vector<8x128xf32>
    %12 = vector.broadcast %10 : vector<1x128xf32> to vector<8x128xf32>
    %13 = arith.mulf %11, %12 : vector<8x128xf32>
    %14 = arith.addf %8, %13 : vector<8x128xf32>
    %15 = vector.extract_strided_slice %0 {offsets = [0, 2], sizes = [8, 1], strides = [1, 1]} : vector<8x3xf32> to vector<8x1xf32>
    %16 = vector.extract_strided_slice %2 {offsets = [3, 0], sizes = [1, 128], strides = [1, 1]} : vector<5x128xf32> to vector<1x128xf32>
    %17 = vector.broadcast %15 : vector<8x1xf32> to vector<8x128xf32>
    %18 = vector.broadcast %16 : vector<1x128xf32> to vector<8x128xf32>
    %19 = arith.mulf %17, %18 : vector<8x128xf32>
    %20 = arith.addf %14, %19 : vector<8x128xf32>
    %21 = vector.extract_strided_slice %2 {offsets = [4, 0], sizes = [1, 128], strides = [1, 1]} : vector<5x128xf32> to vector<1x128xf32>
    %22 = vector.broadcast %21 : vector<1x128xf32> to vector<8x128xf32>
    %23 = arith.subf %20, %22 : vector<8x128xf32>
    %24 = vector.broadcast %3 : vector<1x128xf32> to vector<8x128xf32>
    %25 = arith.subf %23, %24 : vector<8x128xf32>
    %cst = arith.constant 0.000000e+00 : f32
    %26 = vector.broadcast %cst : f32 to vector<8x128xf32>
    %27 = arith.maximumf %25, %26 : vector<8x128xf32>
    %28 = math.absf %25 : vector<8x128xf32>
    %cst_5 = arith.constant 0.000000e+00 : f32
    %29 = vector.broadcast %cst_5 : f32 to vector<8x128xf32>
    %30 = arith.subf %29, %28 : vector<8x128xf32>
    %31 = math.exp %30 : vector<8x128xf32>
    %32 = math.log1p %31 : vector<8x128xf32>
    %33 = arith.addf %27, %32 : vector<8x128xf32>
    %34 = vector.broadcast %3 : vector<1x128xf32> to vector<8x128xf32>
    %35 = arith.addf %23, %34 : vector<8x128xf32>
    %cst_6 = arith.constant 0.000000e+00 : f32
    %36 = vector.broadcast %cst_6 : f32 to vector<8x128xf32>
    %37 = arith.maximumf %35, %36 : vector<8x128xf32>
    %38 = math.absf %35 : vector<8x128xf32>
    %cst_7 = arith.constant 0.000000e+00 : f32
    %39 = vector.broadcast %cst_7 : f32 to vector<8x128xf32>
    %40 = arith.subf %39, %38 : vector<8x128xf32>
    %41 = math.exp %40 : vector<8x128xf32>
    %42 = math.log1p %41 : vector<8x128xf32>
    %43 = arith.addf %37, %42 : vector<8x128xf32>
    %44 = arith.subf %33, %43 : vector<8x128xf32>
    %45 = vector.broadcast %1 : vector<8x1xf32> to vector<8x128xf32>
    %46 = arith.mulf %45, %44 : vector<8x128xf32>
    %cst_8 = arith.constant dense<0.000000e+00> : vector<128xf32>
    %47 = vector.multi_reduction <add>, %46, %cst_8 [0] : vector<8x128xf32> to vector<128xf32>
    %48 = vector.shape_cast %47 : vector<128xf32> to vector<1x128xf32>
    %c0_9 = arith.constant 0 : index
    %c0_10 = arith.constant 0 : index
    %49 = vector.load %arg4[%c0_9, %c0_10] : memref<1x128xf32, #tpu.memory_space<vmem>>, vector<1x128xf32>
    tpu.vector_store %arg4[%c0_9, %c0_10], %48 {strides = array<i32>} : memref<1x128xf32, #tpu.memory_space<vmem>>, vector<1x128xf32>,
    return
  }
  func.func @transform_0(%arg0: i32) -> (i32, i32) {
    %c0_i32 = arith.constant 0 : i32
    %c0_i32_0 = arith.constant 0 : i32
    return %c0_i32, %arg0 : i32, i32
  }
  func.func @transform_1(%arg0: i32) -> (i32, i32) {
    %c0_i32 = arith.constant 0 : i32
    %c0_i32_0 = arith.constant 0 : i32
    %c0_i32_1 = arith.constant 0 : i32
    return %c0_i32, %c0_i32_0 : i32, i32
  }
  func.func @transform_2(%arg0: i32) -> (i32, i32) {
    %c0_i32 = arith.constant 0 : i32
    %c0_i32_0 = arith.constant 0 : i32
    %c0_i32_1 = arith.constant 0 : i32
    return %c0_i32, %c0_i32_0 : i32, i32
  }
  func.func @transform_3(%arg0: i32) -> (i32, i32) {
    %c0_i32 = arith.constant 0 : i32
    %c0_i32_0 = arith.constant 0 : i32
    return %c0_i32, %arg0 : i32, i32
  }
}

</mosaic_0001>

<llo_original>
// kernel: tpu_custom_call.1
$region0: #{tpu_custom_call.1}
  #allocation0 [shape = 'u32[]', space=smem, size = 0x4, offset = 0x4, fixed_abs, tag = 'smem constant byte address 0x4 - core index']
  #allocation1 [shape = 'u32[144,128]{1,0:T(1,128)}', space=vmem, size = 0x12000, scoped, tag = 'internal scratch']
  %s0 = inlined_call_operand.vmem [shape: f32[5,128], index: 0, kind: input, shape index: {}]
  %s1 = inlined_call_operand.vmem [shape: f32[8,3], index: 1, kind: input, shape index: {}]
  %s2 = inlined_call_operand.vmem [shape: f32[8,1], index: 2, kind: input, shape index: {}]
  %s3 = inlined_call_operand.hbm [shape: f32[1,128], index: 3, kind: output, shape index: {}]
  %s4 = sld [smem:[#allocation0]]
  $region22: #{tpu_custom_call.1} parent=0
    _
  %s6 = ssub.s32 1, %s4
  %s7 = scalar_select 0, %s6, %s4
  $region1: #{tpu_custom_call.1} parent=0
    #allocation2 [shape = 'u8[512]{0}', space=vmem, size = 0x400, scoped, tag = 'output window, operand 0, single buffered']
    #allocation3 [shape = 's32[1]{0}', space=sflag, size = 0x4, scoped, tag = 'scoped memory for tpu_custom_call.1']
    %8 = vsyncpa [#allocation3], 0
    // Predicated region
    $region2: #{tpu_custom_call.1} parent=1 // pred_check
      _
    $region3: #{tpu_custom_call.1} parent=1 // pred_check_branch
      %10 = sbr.rel (0) target = $region5
    $region4: #{tpu_custom_call.1} parent=1 // pred_region
      _
    $region5: #{tpu_custom_call.1} parent=1 // pred_fallthru
      _
    // Predicated region
    $region6: #{tpu_custom_call.1} parent=1 // pred_check
      _
    $region7: #{tpu_custom_call.1} parent=1 // pred_check_branch
      %12 = sbr.rel (0) target = $region9
    $region8: #{tpu_custom_call.1} parent=1 // pred_region
      _
    $region9: #{tpu_custom_call.1} parent=1 // pred_fallthru
      _
    // Predicated region
    $region10: #{tpu_custom_call.1} parent=1 // pred_check
      _
    $region11: #{tpu_custom_call.1} parent=1 // pred_check_branch
      %14 = sbr.rel (0) target = $region13
    $region12: #{tpu_custom_call.1} parent=1 // pred_region
      _
    $region13: #{tpu_custom_call.1} parent=1 // pred_fallthru
      _
    %v15 = vld [vmem:[%s1] sm:$0xff]
    %v16 = vld [vmem:[%s2] sm:$0xff]
    %v17 = vld [vmem:[%s0] sm:$0x1f]
    %19 = vset.pattern.permute.xlu0 0
    %20 = vperm.xlu0 %19, %v15
    %v21 = vpop.permute.xlu0 %20
    %v23 = vlaneseq
    %v24 = vshrl.u32 %v23, 7
    %v25 = vsub.s32 1, %v24
    %v26 = vrot.slane %v17, %v25
    %v27 = vmul.f32 %v21, %v26
    %28 = vset.pattern.permute.xlu0 1
    %29 = vperm.xlu0 %28, %v15
    %v30 = vpop.permute.xlu0 %29
    %v32 = vlaneseq
    %v33 = vshrl.u32 %v32, 7
    %v34 = vsub.s32 2, %v33
    %v35 = vrot.slane %v17, %v34
    %v36 = vmul.f32 %v30, %v35
    %v37 = vadd.f32 %v27, %v36
    %38 = vset.pattern.permute.xlu0 2
    %39 = vperm.xlu0 %38, %v15
    %v40 = vpop.permute.xlu0 %39
    %v42 = vlaneseq
    %v43 = vshrl.u32 %v42, 7
    %v44 = vsub.s32 3, %v43
    %v45 = vrot.slane %v17, %v44
    %v46 = vmul.f32 %v40, %v45
    %v47 = vadd.f32 %v37, %v46
    %v48 = vlaneseq
    %v49 = vshrl.u32 %v48, 7
    %v50 = vsub.s32 4, %v49
    %v51 = vrot.slane %v17, %v50
    %v52 = vsub.f32 %v47, %v51
    %v53 = vlaneseq
    %v54 = vshrl.u32 %v53, 7
    %v55 = vsub.s32 0, %v54
    %v56 = vrot.slane %v17, %v55
    %v57 = vsub.f32 %v52, %v56
    %v58 = vmax.f32 %v57, 0.0
    %v59 = vand.u32 2147483647, %v57
    %v60 = vsub.f32 0.0, %v59
    %v61 = vmul.f32 %v60, 1.442695
    %v62 = vpow.pop %v61
    %v63 = vadd.f32 %v62, 1.0
    %v64 = vlog2.pop %v63
    %v65 = vmul.f32 %v64, 0.6931472
    %v66 = vmul.f32 -0.5, %v62
    %v67 = vadd.f32 %v66, 1.0
    %v68 = vmul.f32 %v67, %v62
    %v69 = vand.u32 2147483647, %v62
    %vm70 = vcmp.lt.f32.partialorder %v69, 0.0004427343
    %v71 = vsel %vm70, %v68, %v65
    %v72 = vadd.f32 %v58, %v71
    %v73 = vadd.f32 %v52, %v56
    %v74 = vmax.f32 %v73, 0.0
    %v75 = vand.u32 2147483647, %v73
    %v76 = vsub.f32 0.0, %v75
    %v77 = vmul.f32 %v76, 1.442695
    %v78 = vpow.pop %v77
    %v79 = vadd.f32 %v78, 1.0
    %v80 = vlog2.pop %v79
    %v81 = vmul.f32 %v80, 0.6931472
    %v82 = vmul.f32 -0.5, %v78
    %v83 = vadd.f32 %v82, 1.0
    %v84 = vmul.f32 %v83, %v78
    %v85 = vand.u32 2147483647, %v78
    %vm86 = vcmp.lt.f32.partialorder %v85, 0.0004427343
    %v87 = vsel %vm86, %v84, %v81
    %v88 = vadd.f32 %v74, %v87
    %v89 = vsub.f32 %v72, %v88
    %91 = vset.pattern.permute.xlu0 0
    %92 = vperm.xlu0 %91, %v16
    %v93 = vpop.permute.xlu0 %92
    %v95 = vmul.f32 %v93, %v89
    %v96 = vrot.slane %v95, 4
    %v97 = vadd.f32 %v95, %v96
    %v98 = vrot.slane %v97, 2
    %v99 = vadd.f32 %v97, %v98
    %v100 = vrot.slane %v99, 1
    %v101 = vadd.f32 %v99, %v100
    %102 = vst [vmem:[#allocation2] sm:$0x1] %v101
    // Predicated region
    $region14: #{tpu_custom_call.1} parent=1 // pred_check
      _
    $region15: #{tpu_custom_call.1} parent=1 // pred_check_branch
      %104 = sbr.rel (0) target = $region17
    $region16: #{tpu_custom_call.1} parent=1 // pred_region
      %s106 = ssub.s32 16, 16
      %107 = vsyncadd [#allocation3], %s106
      %s109 = sshll.u32 [#allocation2], 4
      %s110 = int_to_ptr.vmem [resolvable:$true] %s109
      %112 = dma.vmem_to_hbm [thread:$0]  %s110, 16, %s3, [#allocation3]
    $region17: #{tpu_custom_call.1} parent=1 // pred_fallthru
      _
    // Predicated region
    $region18: #{tpu_custom_call.1} parent=1 // pred_check
      _
    $region19: #{tpu_custom_call.1} parent=1 // pred_check_branch
      %114 = sbr.rel (0) target = $region21
    $region20: #{tpu_custom_call.1} parent=1 // pred_region
      %115 = dma.done [#allocation3], 16
    $region21: #{tpu_custom_call.1} parent=1 // pred_fallthru
      _
    %116 = vsyncpa [#allocation3], 1

</llo_original>
